<compile_context>
chip_gen: v5e
topology: v5e:2x2
jax: 0.10.0
libtpu: 0.0.40
codegen_flags: <defaults>
</compile_context>

<pallas_src>
import functools

import jax
import jax.numpy as jnp
from jax.experimental import pallas as pl
from jax.experimental.pallas import tpu as pltpu

_LANE = 128
_CHUNK_ROWS = 512                       # in-kernel sub-slice -> ~2 MiB live temps
_MAX_BLOCK_ROWS = 8192                  # (8192,128) f32 = 4 MiB / input / pipeline buffer
_VMEM_LIMIT_BYTES = 40 * 1024 * 1024    # explicit scoped-VMEM budget (default is 16-32 MiB)
_PAD_LOGIT = -1e4                       # sentinel: exp(-1e4)=0, max(-1e4,0)=0 -> 0 contribution


def _detect_num_splits():
    """2 shards the leading 'parallel' grid axis across v7x's two TensorCores.

    On single-TC chips (v5e/v6e) a size-2 axis is only a cheap serial iteration,
    so 2 is also the safe fallback when the core count cannot be determined.
    """
    try:
        info = pltpu.get_tpu_info()
        for attr in ("num_tensorcores", "tensorcore_count", "num_cores", "core_count"):
            v = getattr(info, attr, None)
            if isinstance(v, int) and v > 0:
                return 1 if v < 2 else 2
    except Exception:
        pass
    return 2


_NUM_SPLITS = _detect_num_splits()


def _round_up(a, b):
    return ((a + b - 1) // b) * b


def _bce_dice_kernel(x_ref, t_ref, acc_ref, *, n, block_rows, chunk_rows):
    # acc_ref: (1, 4, 8, 128) VMEM-resident output block for this split.
    #   row 0: sum of stable BCE terms, 1: sum(sigmoid(x)*t),
    #   row 2: sum(sigmoid(x)),          3: sum(t)
    split = pl.program_id(0)
    blk = pl.program_id(1)
    b = split * pl.num_programs(1) + blk          # nominal (unclamped) block index

    @pl.when(blk == 0)
    def _():
        acc_ref[...] = jnp.zeros_like(acc_ref)

    # All of these are static Python ints (shapes are static under jit).
    num_chunks = block_rows // chunk_rows
    rows_with_data = pl.cdiv(n, _LANE)            # rows containing any real element
    full_blocks = n // (block_rows * _LANE)       # blocks < this need no tail mask
    r_full = n // _LANE                           # fully-valid rows
    c_rem = n % _LANE                             # valid lanes in row r_full

    def accumulate(masked):
        def chunk(c, carry):
            bce_a, inter_a, p_a, t_a = carry
            r0 = c * chunk_rows
            if not isinstance(r0, int):
                r0 = pl.multiple_of(r0, chunk_rows)
            x = x_ref[pl.ds(r0, chunk_rows), :].astype(jnp.float32)
            t = t_ref[pl.ds(r0, chunk_rows), :].astype(jnp.float32)
            if masked:
                row = jax.lax.broadcasted_iota(jnp.int32, (chunk_rows, _LANE), 0)
                col = jax.lax.broadcasted_iota(jnp.int32, (chunk_rows, _LANE), 1)
                gr = b * block_rows + r0 + row    # global row index of each element
                valid = (gr < r_full) | ((gr == r_full) & (col < c_rem))
                x = jnp.where(valid, x, _PAD_LOGIT)
                t = jnp.where(valid, t, 0.0)

            e = jnp.exp(-jnp.abs(x))                       # shared by BCE tail & sigmoid
            # Stable BCE-with-logits: max(x,0) - x*t + log1p(exp(-|x|))
            bce = jnp.maximum(x, 0.0) - x * t + jnp.log1p(e)
            r = pl.reciprocal(1.0 + e, approx=False)       # EUP, not a VALU divide
            p = jnp.where(x >= 0.0, r, e * r)              # sigmoid(x), one exp total

            def fold(v):                                   # (chunk_rows,128)->(8,128) VPU adds
                return v.reshape(-1, 8, _LANE).sum(axis=0)

            return (bce_a + fold(bce), inter_a + fold(p * t),
                    p_a + fold(p), t_a + fold(t))

        zero = jnp.zeros((8, _LANE), jnp.float32)
        init = (zero, zero, zero, zero)
        if num_chunks == 1:
            bce_a, inter_a, p_a, t_a = chunk(0, init)
        else:
            bce_a, inter_a, p_a, t_a = jax.lax.fori_loop(0, num_chunks, chunk, init)

        acc_ref[0, 0] += bce_a
        acc_ref[0, 1] += inter_a
        acc_ref[0, 2] += p_a
        acc_ref[0, 3] += t_a

    # Duplicated (clamped) blocks from the split decomposition carry no data.
    has_data = b * block_rows < rows_with_data

    @pl.when(jnp.logical_and(has_data, b < full_blocks))
    def _():
        accumulate(masked=False)

    @pl.when(jnp.logical_and(has_data, b >= full_blocks))
    def _():
        accumulate(masked=True)


def _reduction_partials(x2, t2, *, n, block_rows, chunk_rows, nblocks, num_splits):
    blocks_per_split = pl.cdiv(nblocks, num_splits)

    def in_map(c, i):
        # Clamp so no DMA window ever starts out of bounds; the duplicated
        # blocks this creates are skipped inside the kernel (has_data == False).
        return (jnp.minimum(c * blocks_per_split + i, nblocks - 1), 0)

    in_spec = pl.BlockSpec((block_rows, _LANE), in_map)
    out_spec = pl.BlockSpec((1, 4, 8, _LANE), lambda c, i: (c, 0, 0, 0))

    kernel = functools.partial(_bce_dice_kernel, n=n, block_rows=block_rows,
                               chunk_rows=chunk_rows)
    return pl.pallas_call(
        kernel,
        out_shape=jax.ShapeDtypeStruct((num_splits, 4, 8, _LANE), jnp.float32),
        grid_spec=pltpu.PrefetchScalarGridSpec(
            num_scalar_prefetch=0,
            grid=(num_splits, blocks_per_split),
            in_specs=[in_spec, in_spec],
            out_specs=out_spec,
        ),
        compiler_params=pltpu.CompilerParams(
            dimension_semantics=("parallel", "arbitrary"),
            vmem_limit_bytes=_VMEM_LIMIT_BYTES),
    )(x2, t2)


@functools.partial(jax.jit, static_argnames=("log_dice",))
def bce_dice_loss(inputs, target, log_dice=False):
    """BCEWithLogitsLoss(mean) + (1 - dice) [or -log(dice) if log_dice]."""
    n = inputs.size
    xf = inputs.reshape(-1)                      # original dtype; upcast in-kernel
    tf = target.reshape(-1)

    # Only a tiny alignment pad (and only when n % 128 != 0 or n < 1024); the
    # common NCHW case hits the no-copy path.  The tail is also masked
    # in-kernel, so padded values never influence the result.
    padded_n = max(_round_up(n, _LANE), 8 * _LANE)
    pad = padded_n - n
    if pad:
        xf = jnp.pad(xf, (0, pad), constant_values=_PAD_LOGIT)
        tf = jnp.pad(tf, (0, pad), constant_values=0)

    rows = padded_n // _LANE
    if rows >= _CHUNK_ROWS:
        block_rows = min(_MAX_BLOCK_ROWS, (rows // _CHUNK_ROWS) * _CHUNK_ROWS)
        chunk_rows = _CHUNK_ROWS
    else:
        block_rows = (rows // 8) * 8             # rows >= 8 guaranteed
        chunk_rows = block_rows
    nblocks = pl.cdiv(rows, block_rows)

    x2 = xf.reshape(rows, _LANE)
    t2 = tf.reshape(rows, _LANE)

    partials = _reduction_partials(x2, t2, n=n, block_rows=block_rows,
                                   chunk_rows=chunk_rows, nblocks=nblocks,
                                   num_splits=_NUM_SPLITS)      # (S, 4, 8, 128)
    sums = jnp.sum(partials, axis=(0, 2, 3))                    # (4,)
    bce_sum, inter, psum, tsum = sums[0], sums[1], sums[2], sums[3]

    smooth = 1.0
    bce = bce_sum / n
    dice = (2.0 * inter + smooth) / (psum + tsum + smooth)
    dice_loss = -jnp.log(dice) if log_dice else 1.0 - dice
    return bce + dice_loss


def _reference(inputs, target, log_dice=False):
    x = inputs.astype(jnp.float32).reshape(-1)
    t = target.astype(jnp.float32).reshape(-1)
    bce = jnp.mean(jnp.maximum(x, 0.0) - x * t + jnp.log1p(jnp.exp(-jnp.abs(x))))
    p = jax.nn.sigmoid(x)
    dice = (2.0 * jnp.sum(p * t) + 1.0) / (jnp.sum(p) + jnp.sum(t) + 1.0)
    dl = -jnp.log(dice) if log_dice else 1.0 - dice
    return bce + dl


if __name__ == "__main__":
    key = jax.random.PRNGKey(0)

    def check(idx, shape, log_dice):
        kx, kt = jax.random.split(jax.random.fold_in(key, idx))
        x = jax.random.normal(kx, shape, dtype=jnp.float32)
        t = jax.random.bernoulli(kt, p=0.5, shape=shape).astype(jnp.float32)
        out = bce_dice_loss(x, t, log_dice=log_dice)
        jax.block_until_ready(out)
        ref = _reference(x, t, log_dice=log_dice)
        assert jnp.allclose(out, ref, rtol=1e-5, atol=1e-5), (shape, out, ref)

    # Primary small NCHW case from the module spec (no pad, single full block).
    check(0, (2, 4, 16, 16), log_dice=False)
    # Unaligned size: exercises the tiny alignment pad + in-kernel tail mask.
    check(1, (3, 5, 7, 11), log_dice=True)
    # Larger case: exercises chunked fori_loop, multi-block grid, ragged last block.
    check(2, (4, 3, 333, 333), log_dice=False)

    print("KERNEL_OK")
</pallas_src>

<mosaic_0001>
module attributes {stable_mosaic.version = 11 : i64} {
  func.func @_bce_dice_kernel(%arg0: i32, %arg1: i32, %arg2: memref<16x128xf32, #tpu.memory_space<vmem>>, %arg3: memref<16x128xf32, #tpu.memory_space<vmem>>, %arg4: memref<1x4x8x128xf32, #tpu.memory_space<vmem>>) attributes {dimension_semantics = [#tpu.dimension_semantics<parallel>, #tpu.dimension_semantics<arbitrary>], iteration_bounds = array<i64: 2, 1>, scalar_prefetch = 0 : i64, scratch_operands = 0 : i64, tpu.core_type = #tpu.core_type<tc>, window_params = [{transform_indices = @transform_0, window_bounds = array<i64: 16, 128>}, {transform_indices = @transform_1, window_bounds = array<i64: 16, 128>}, {transform_indices = @transform_2, window_bounds = array<i64: 1, 4, 8, 128>}]} {
    %c1_i32 = arith.constant 1 : i32
    %0 = arith.muli %arg0, %c1_i32 : i32
    %1 = arith.addi %0, %arg1 : i32
    %c0_i32 = arith.constant 0 : i32
    %2 = arith.cmpi eq, %arg1, %c0_i32 : i32
    %3 = arith.extui %2 : i1 to i32
    %c0_i32_0 = arith.constant 0 : i32
    %4 = arith.cmpi ne, %3, %c0_i32_0 : i32
    scf.if %4 {
      %cst = arith.constant 0.000000e+00 : f32
      %15 = vector.broadcast %cst : f32 to vector<1x4x8x128xf32>
      %c0 = arith.constant 0 : index
      %c0_6 = arith.constant 0 : index
      %c0_7 = arith.constant 0 : index
      %c0_8 = arith.constant 0 : index
      %16 = vector.load %arg4[%c0, %c0_6, %c0_7, %c0_8] : memref<1x4x8x128xf32, #tpu.memory_space<vmem>>, vector<1x4x8x128xf32>
      tpu.vector_store %arg4[%c0, %c0_6, %c0_7, %c0_8], %15 {strides = array<i32>} : memref<1x4x8x128xf32, #tpu.memory_space<vmem>>, vector<1x4x8x128xf32>,
    } else {
    }
    %c16_i32 = arith.constant 16 : i32
    %5 = arith.muli %1, %c16_i32 : i32
    %c16_i32_1 = arith.constant 16 : i32
    %6 = arith.cmpi slt, %5, %c16_i32_1 : i32
    %c1_i32_2 = arith.constant 1 : i32
    %7 = arith.cmpi slt, %1, %c1_i32_2 : i32
    %8 = arith.andi %6, %7 : i1
    %9 = arith.extui %8 : i1 to i32
    %c0_i32_3 = arith.constant 0 : i32
    %10 = arith.cmpi ne, %9, %c0_i32_3 : i32
    scf.if %10 {
      %cst = arith.constant 0.000000e+00 : f32
      %15 = vector.broadcast %cst : f32 to vector<8x128xf32>
      %c0 = arith.constant 0 : index
      %c0_6 = arith.constant 0 : index
      %16 = vector.load %arg2[%c0, %c0_6] : memref<16x128xf32, #tpu.memory_space<vmem>>, vector<16x128xf32>
      %c0_7 = arith.constant 0 : index
      %c0_8 = arith.constant 0 : index
      %17 = vector.load %arg3[%c0_7, %c0_8] : memref<16x128xf32, #tpu.memory_space<vmem>>, vector<16x128xf32>
      %18 = math.absf %16 : vector<16x128xf32>
      %cst_9 = arith.constant 0.000000e+00 : f32
      %19 = vector.broadcast %cst_9 : f32 to vector<16x128xf32>
      %20 = arith.subf %19, %18 : vector<16x128xf32>
      %21 = math.exp %20 : vector<16x128xf32>
      %cst_10 = arith.constant 0.000000e+00 : f32
      %22 = vector.broadcast %cst_10 : f32 to vector<16x128xf32>
      %23 = arith.maximumf %16, %22 : vector<16x128xf32>
      %24 = arith.mulf %16, %17 : vector<16x128xf32>
      %25 = arith.subf %23, %24 : vector<16x128xf32>
      %26 = math.log1p %21 : vector<16x128xf32>
      %27 = arith.addf %25, %26 : vector<16x128xf32>
      %cst_11 = arith.constant 1.000000e+00 : f32
      %28 = vector.broadcast %cst_11 : f32 to vector<16x128xf32>
      %29 = arith.addf %28, %21 : vector<16x128xf32>
      %30 = tpu.reciprocal %29 : vector<16x128xf32> -> vector<16x128xf32>
      %cst_12 = arith.constant 0.000000e+00 : f32
      %31 = vector.broadcast %cst_12 : f32 to vector<16x128xf32>
      %32 = arith.cmpf oge, %16, %31 : vector<16x128xf32>
      %33 = arith.mulf %21, %30 : vector<16x128xf32>
      %34 = arith.select %32, %30, %33 : vector<16x128xi1>, vector<16x128xf32>
      %35 = vector.shape_cast %27 : vector<16x128xf32> to vector<2x8x128xf32>
      %cst_13 = arith.constant dense<0.000000e+00> : vector<8x128xf32>
      %36 = vector.multi_reduction <add>, %35, %cst_13 [0] : vector<2x8x128xf32> to vector<8x128xf32>
      %37 = arith.addf %15, %36 : vector<8x128xf32>
      %38 = arith.mulf %34, %17 : vector<16x128xf32>
      %39 = vector.shape_cast %38 : vector<16x128xf32> to vector<2x8x128xf32>
      %cst_14 = arith.constant dense<0.000000e+00> : vector<8x128xf32>
      %40 = vector.multi_reduction <add>, %39, %cst_14 [0] : vector<2x8x128xf32> to vector<8x128xf32>
      %41 = arith.addf %15, %40 : vector<8x128xf32>
      %42 = vector.shape_cast %34 : vector<16x128xf32> to vector<2x8x128xf32>
      %cst_15 = arith.constant dense<0.000000e+00> : vector<8x128xf32>
      %43 = vector.multi_reduction <add>, %42, %cst_15 [0] : vector<2x8x128xf32> to vector<8x128xf32>
      %44 = arith.addf %15, %43 : vector<8x128xf32>
      %45 = vector.shape_cast %17 : vector<16x128xf32> to vector<2x8x128xf32>
      %cst_16 = arith.constant dense<0.000000e+00> : vector<8x128xf32>
      %46 = vector.multi_reduction <add>, %45, %cst_16 [0] : vector<2x8x128xf32> to vector<8x128xf32>
      %47 = arith.addf %15, %46 : vector<8x128xf32>
      %c0_17 = arith.constant 0 : index
      %c0_18 = arith.constant 0 : index
      %c0_19 = arith.constant 0 : index
      %c0_20 = arith.constant 0 : index
      %48 = vector.load %arg4[%c0_17, %c0_18, %c0_19, %c0_20] : memref<1x4x8x128xf32, #tpu.memory_space<vmem>>, vector<1x1x8x128xf32>
      %49 = vector.shape_cast %48 : vector<1x1x8x128xf32> to vector<8x128xf32>
      %50 = arith.addf %49, %37 : vector<8x128xf32>
      %c0_21 = arith.constant 0 : index
      %c0_22 = arith.constant 0 : index
      %c0_23 = arith.constant 0 : index
      %c0_24 = arith.constant 0 : index
      %51 = vector.load %arg4[%c0_21, %c0_22, %c0_23, %c0_24] : memref<1x4x8x128xf32, #tpu.memory_space<vmem>>, vector<1x1x8x128xf32>
      %52 = vector.shape_cast %51 : vector<1x1x8x128xf32> to vector<8x128xf32>
      %53 = vector.shape_cast %50 : vector<8x128xf32> to vector<1x1x8x128xf32>
      tpu.vector_store %arg4[%c0_21, %c0_22, %c0_23, %c0_24], %53 {strides = array<i32>} : memref<1x4x8x128xf32, #tpu.memory_space<vmem>>, vector<1x1x8x128xf32>,
      %c0_25 = arith.constant 0 : index
      %c1 = arith.constant 1 : index
      %c0_26 = arith.constant 0 : index
      %c0_27 = arith.constant 0 : index
      %54 = vector.load %arg4[%c0_25, %c1, %c0_26, %c0_27] : memref<1x4x8x128xf32, #tpu.memory_space<vmem>>, vector<1x1x8x128xf32>
      %55 = vector.shape_cast %54 : vector<1x1x8x128xf32> to vector<8x128xf32>
      %56 = arith.addf %55, %41 : vector<8x128xf32>
      %c0_28 = arith.constant 0 : index
      %c1_29 = arith.constant 1 : index
      %c0_30 = arith.constant 0 : index
      %c0_31 = arith.constant 0 : index
      %57 = vector.load %arg4[%c0_28, %c1_29, %c0_30, %c0_31] : memref<1x4x8x128xf32, #tpu.memory_space<vmem>>, vector<1x1x8x128xf32>
      %58 = vector.shape_cast %57 : vector<1x1x8x128xf32> to vector<8x128xf32>
      %59 = vector.shape_cast %56 : vector<8x128xf32> to vector<1x1x8x128xf32>
      tpu.vector_store %arg4[%c0_28, %c1_29, %c0_30, %c0_31], %59 {strides = array<i32>} : memref<1x4x8x128xf32, #tpu.memory_space<vmem>>, vector<1x1x8x128xf32>,
      %c0_32 = arith.constant 0 : index
      %c2 = arith.constant 2 : index
      %c0_33 = arith.constant 0 : index
      %c0_34 = arith.constant 0 : index
      %60 = vector.load %arg4[%c0_32, %c2, %c0_33, %c0_34] : memref<1x4x8x128xf32, #tpu.memory_space<vmem>>, vector<1x1x8x128xf32>
      %61 = vector.shape_cast %60 : vector<1x1x8x128xf32> to vector<8x128xf32>
      %62 = arith.addf %61, %44 : vector<8x128xf32>
      %c0_35 = arith.constant 0 : index
      %c2_36 = arith.constant 2 : index
      %c0_37 = arith.constant 0 : index
      %c0_38 = arith.constant 0 : index
      %63 = vector.load %arg4[%c0_35, %c2_36, %c0_37, %c0_38] : memref<1x4x8x128xf32, #tpu.memory_space<vmem>>, vector<1x1x8x128xf32>
      %64 = vector.shape_cast %63 : vector<1x1x8x128xf32> to vector<8x128xf32>
      %65 = vector.shape_cast %62 : vector<8x128xf32> to vector<1x1x8x128xf32>
      tpu.vector_store %arg4[%c0_35, %c2_36, %c0_37, %c0_38], %65 {strides = array<i32>} : memref<1x4x8x128xf32, #tpu.memory_space<vmem>>, vector<1x1x8x128xf32>,
      %c0_39 = arith.constant 0 : index
      %c3 = arith.constant 3 : index
      %c0_40 = arith.constant 0 : index
      %c0_41 = arith.constant 0 : index
      %66 = vector.load %arg4[%c0_39, %c3, %c0_40, %c0_41] : memref<1x4x8x128xf32, #tpu.memory_space<vmem>>, vector<1x1x8x128xf32>
      %67 = vector.shape_cast %66 : vector<1x1x8x128xf32> to vector<8x128xf32>
      %68 = arith.addf %67, %47 : vector<8x128xf32>
      %c0_42 = arith.constant 0 : index
      %c3_43 = arith.constant 3 : index
      %c0_44 = arith.constant 0 : index
      %c0_45 = arith.constant 0 : index
      %69 = vector.load %arg4[%c0_42, %c3_43, %c0_44, %c0_45] : memref<1x4x8x128xf32, #tpu.memory_space<vmem>>, vector<1x1x8x128xf32>
      %70 = vector.shape_cast %69 : vector<1x1x8x128xf32> to vector<8x128xf32>
      %71 = vector.shape_cast %68 : vector<8x128xf32> to vector<1x1x8x128xf32>
      tpu.vector_store %arg4[%c0_42, %c3_43, %c0_44, %c0_45], %71 {strides = array<i32>} : memref<1x4x8x128xf32, #tpu.memory_space<vmem>>, vector<1x1x8x128xf32>,
    } else {
    }
    %c1_i32_4 = arith.constant 1 : i32
    %11 = arith.cmpi sge, %1, %c1_i32_4 : i32
    %12 = arith.andi %6, %11 : i1
    %13 = arith.extui %12 : i1 to i32
    %c0_i32_5 = arith.constant 0 : i32
    %14 = arith.cmpi ne, %13, %c0_i32_5 : i32
    scf.if %14 {
      %cst = arith.constant 0.000000e+00 : f32
      %15 = vector.broadcast %cst : f32 to vector<8x128xf32>
      %c0 = arith.constant 0 : index
      %c0_6 = arith.constant 0 : index
      %16 = vector.load %arg2[%c0, %c0_6] : memref<16x128xf32, #tpu.memory_space<vmem>>, vector<16x128xf32>
      %c0_7 = arith.constant 0 : index
      %c0_8 = arith.constant 0 : index
      %17 = vector.load %arg3[%c0_7, %c0_8] : memref<16x128xf32, #tpu.memory_space<vmem>>, vector<16x128xf32>
      %18 = tpu.iota {dimensions = array<i32: 0>} : vector<16x128xi32>
      %19 = tpu.iota {dimensions = array<i32: 1>} : vector<16x128xi32>
      %c16_i32_9 = arith.constant 16 : i32
      %20 = arith.muli %1, %c16_i32_9 : i32
      %c0_i32_10 = arith.constant 0 : i32
      %21 = arith.addi %20, %c0_i32_10 : i32
      %22 = vector.broadcast %21 : i32 to vector<16x128xi32>
      %23 = arith.addi %22, %18 : vector<16x128xi32>
      %c16_i32_11 = arith.constant 16 : i32
      %24 = vector.broadcast %c16_i32_11 : i32 to vector<16x128xi32>
      %25 = arith.cmpi slt, %23, %24 : vector<16x128xi32>
      %c16_i32_12 = arith.constant 16 : i32
      %26 = vector.broadcast %c16_i32_12 : i32 to vector<16x128xi32>
      %27 = arith.cmpi eq, %23, %26 : vector<16x128xi32>
      %c0_i32_13 = arith.constant 0 : i32
      %28 = vector.broadcast %c0_i32_13 : i32 to vector<16x128xi32>
      %29 = arith.cmpi slt, %19, %28 : vector<16x128xi32>
      %30 = arith.andi %27, %29 : vector<16x128xi1>
      %31 = arith.ori %25, %30 : vector<16x128xi1>
      %cst_14 = arith.constant -1.000000e+04 : f32
      %32 = vector.broadcast %cst_14 : f32 to vector<16x128xf32>
      %33 = arith.select %31, %16, %32 : vector<16x128xi1>, vector<16x128xf32>
      %cst_15 = arith.constant 0.000000e+00 : f32
      %34 = vector.broadcast %cst_15 : f32 to vector<16x128xf32>
      %35 = arith.select %31, %17, %34 : vector<16x128xi1>, vector<16x128xf32>
      %36 = math.absf %33 : vector<16x128xf32>
      %cst_16 = arith.constant 0.000000e+00 : f32
      %37 = vector.broadcast %cst_16 : f32 to vector<16x128xf32>
      %38 = arith.subf %37, %36 : vector<16x128xf32>
      %39 = math.exp %38 : vector<16x128xf32>
      %cst_17 = arith.constant 0.000000e+00 : f32
      %40 = vector.broadcast %cst_17 : f32 to vector<16x128xf32>
      %41 = arith.maximumf %33, %40 : vector<16x128xf32>
      %42 = arith.mulf %33, %35 : vector<16x128xf32>
      %43 = arith.subf %41, %42 : vector<16x128xf32>
      %44 = math.log1p %39 : vector<16x128xf32>
      %45 = arith.addf %43, %44 : vector<16x128xf32>
      %cst_18 = arith.constant 1.000000e+00 : f32
      %46 = vector.broadcast %cst_18 : f32 to vector<16x128xf32>
      %47 = arith.addf %46, %39 : vector<16x128xf32>
      %48 = tpu.reciprocal %47 : vector<16x128xf32> -> vector<16x128xf32>
      %cst_19 = arith.constant 0.000000e+00 : f32
      %49 = vector.broadcast %cst_19 : f32 to vector<16x128xf32>
      %50 = arith.cmpf oge, %33, %49 : vector<16x128xf32>
      %51 = arith.mulf %39, %48 : vector<16x128xf32>
      %52 = arith.select %50, %48, %51 : vector<16x128xi1>, vector<16x128xf32>
      %53 = vector.shape_cast %45 : vector<16x128xf32> to vector<2x8x128xf32>
      %cst_20 = arith.constant dense<0.000000e+00> : vector<8x128xf32>
      %54 = vector.multi_reduction <add>, %53, %cst_20 [0] : vector<2x8x128xf32> to vector<8x128xf32>
      %55 = arith.addf %15, %54 : vector<8x128xf32>
      %56 = arith.mulf %52, %35 : vector<16x128xf32>
      %57 = vector.shape_cast %56 : vector<16x128xf32> to vector<2x8x128xf32>
      %cst_21 = arith.constant dense<0.000000e+00> : vector<8x128xf32>
      %58 = vector.multi_reduction <add>, %57, %cst_21 [0] : vector<2x8x128xf32> to vector<8x128xf32>
      %59 = arith.addf %15, %58 : vector<8x128xf32>
      %60 = vector.shape_cast %52 : vector<16x128xf32> to vector<2x8x128xf32>
      %cst_22 = arith.constant dense<0.000000e+00> : vector<8x128xf32>
      %61 = vector.multi_reduction <add>, %60, %cst_22 [0] : vector<2x8x128xf32> to vector<8x128xf32>
      %62 = arith.addf %15, %61 : vector<8x128xf32>
      %63 = vector.shape_cast %35 : vector<16x128xf32> to vector<2x8x128xf32>
      %cst_23 = arith.constant dense<0.000000e+00> : vector<8x128xf32>
      %64 = vector.multi_reduction <add>, %63, %cst_23 [0] : vector<2x8x128xf32> to vector<8x128xf32>
      %65 = arith.addf %15, %64 : vector<8x128xf32>
      %c0_24 = arith.constant 0 : index
      %c0_25 = arith.constant 0 : index
      %c0_26 = arith.constant 0 : index
      %c0_27 = arith.constant 0 : index
      %66 = vector.load %arg4[%c0_24, %c0_25, %c0_26, %c0_27] : memref<1x4x8x128xf32, #tpu.memory_space<vmem>>, vector<1x1x8x128xf32>
      %67 = vector.shape_cast %66 : vector<1x1x8x128xf32> to vector<8x128xf32>
      %68 = arith.addf %67, %55 : vector<8x128xf32>
      %c0_28 = arith.constant 0 : index
      %c0_29 = arith.constant 0 : index
      %c0_30 = arith.constant 0 : index
      %c0_31 = arith.constant 0 : index
      %69 = vector.load %arg4[%c0_28, %c0_29, %c0_30, %c0_31] : memref<1x4x8x128xf32, #tpu.memory_space<vmem>>, vector<1x1x8x128xf32>
      %70 = vector.shape_cast %69 : vector<1x1x8x128xf32> to vector<8x128xf32>
      %71 = vector.shape_cast %68 : vector<8x128xf32> to vector<1x1x8x128xf32>
      tpu.vector_store %arg4[%c0_28, %c0_29, %c0_30, %c0_31], %71 {strides = array<i32>} : memref<1x4x8x128xf32, #tpu.memory_space<vmem>>, vector<1x1x8x128xf32>,
      %c0_32 = arith.constant 0 : index
      %c1 = arith.constant 1 : index
      %c0_33 = arith.constant 0 : index
      %c0_34 = arith.constant 0 : index
      %72 = vector.load %arg4[%c0_32, %c1, %c0_33, %c0_34] : memref<1x4x8x128xf32, #tpu.memory_space<vmem>>, vector<1x1x8x128xf32>
      %73 = vector.shape_cast %72 : vector<1x1x8x128xf32> to vector<8x128xf32>
      %74 = arith.addf %73, %59 : vector<8x128xf32>
      %c0_35 = arith.constant 0 : index
      %c1_36 = arith.constant 1 : index
      %c0_37 = arith.constant 0 : index
      %c0_38 = arith.constant 0 : index
      %75 = vector.load %arg4[%c0_35, %c1_36, %c0_37, %c0_38] : memref<1x4x8x128xf32, #tpu.memory_space<vmem>>, vector<1x1x8x128xf32>
      %76 = vector.shape_cast %75 : vector<1x1x8x128xf32> to vector<8x128xf32>
      %77 = vector.shape_cast %74 : vector<8x128xf32> to vector<1x1x8x128xf32>
      tpu.vector_store %arg4[%c0_35, %c1_36, %c0_37, %c0_38], %77 {strides = array<i32>} : memref<1x4x8x128xf32, #tpu.memory_space<vmem>>, vector<1x1x8x128xf32>,
      %c0_39 = arith.constant 0 : index
      %c2 = arith.constant 2 : index
      %c0_40 = arith.constant 0 : index
      %c0_41 = arith.constant 0 : index
      %78 = vector.load %arg4[%c0_39, %c2, %c0_40, %c0_41] : memref<1x4x8x128xf32, #tpu.memory_space<vmem>>, vector<1x1x8x128xf32>
      %79 = vector.shape_cast %78 : vector<1x1x8x128xf32> to vector<8x128xf32>
      %80 = arith.addf %79, %62 : vector<8x128xf32>
      %c0_42 = arith.constant 0 : index
      %c2_43 = arith.constant 2 : index
      %c0_44 = arith.constant 0 : index
      %c0_45 = arith.constant 0 : index
      %81 = vector.load %arg4[%c0_42, %c2_43, %c0_44, %c0_45] : memref<1x4x8x128xf32, #tpu.memory_space<vmem>>, vector<1x1x8x128xf32>
      %82 = vector.shape_cast %81 : vector<1x1x8x128xf32> to vector<8x128xf32>
      %83 = vector.shape_cast %80 : vector<8x128xf32> to vector<1x1x8x128xf32>
      tpu.vector_store %arg4[%c0_42, %c2_43, %c0_44, %c0_45], %83 {strides = array<i32>} : memref<1x4x8x128xf32, #tpu.memory_space<vmem>>, vector<1x1x8x128xf32>,
      %c0_46 = arith.constant 0 : index
      %c3 = arith.constant 3 : index
      %c0_47 = arith.constant 0 : index
      %c0_48 = arith.constant 0 : index
      %84 = vector.load %arg4[%c0_46, %c3, %c0_47, %c0_48] : memref<1x4x8x128xf32, #tpu.memory_space<vmem>>, vector<1x1x8x128xf32>
      %85 = vector.shape_cast %84 : vector<1x1x8x128xf32> to vector<8x128xf32>
      %86 = arith.addf %85, %65 : vector<8x128xf32>
      %c0_49 = arith.constant 0 : index
      %c3_50 = arith.constant 3 : index
      %c0_51 = arith.constant 0 : index
      %c0_52 = arith.constant 0 : index
      %87 = vector.load %arg4[%c0_49, %c3_50, %c0_51, %c0_52] : memref<1x4x8x128xf32, #tpu.memory_space<vmem>>, vector<1x1x8x128xf32>
      %88 = vector.shape_cast %87 : vector<1x1x8x128xf32> to vector<8x128xf32>
      %89 = vector.shape_cast %86 : vector<8x128xf32> to vector<1x1x8x128xf32>
      tpu.vector_store %arg4[%c0_49, %c3_50, %c0_51, %c0_52], %89 {strides = array<i32>} : memref<1x4x8x128xf32, #tpu.memory_space<vmem>>, vector<1x1x8x128xf32>,
    } else {
    }
    return
  }
  func.func @transform_0(%arg0: i32, %arg1: i32) -> (i32, i32) {
    %c1_i32 = arith.constant 1 : i32
    %0 = arith.muli %arg0, %c1_i32 : i32
    %1 = arith.addi %0, %arg1 : i32
    %c0_i32 = arith.constant 0 : i32
    %2 = arith.minsi %1, %c0_i32 : i32
    %c0_i32_0 = arith.constant 0 : i32
    %c0_i32_1 = arith.constant 0 : i32
    return %2, %c0_i32_0 : i32, i32
  }
  func.func @transform_1(%arg0: i32, %arg1: i32) -> (i32, i32) {
    %c1_i32 = arith.constant 1 : i32
    %0 = arith.muli %arg0, %c1_i32 : i32
    %1 = arith.addi %0, %arg1 : i32
    %c0_i32 = arith.constant 0 : i32
    %2 = arith.minsi %1, %c0_i32 : i32
    %c0_i32_0 = arith.constant 0 : i32
    %c0_i32_1 = arith.constant 0 : i32
    return %2, %c0_i32_0 : i32, i32
  }
  func.func @transform_2(%arg0: i32, %arg1: i32) -> (i32, i32, i32, i32) {
    %c0_i32 = arith.constant 0 : i32
    %c0_i32_0 = arith.constant 0 : i32
    %c0_i32_1 = arith.constant 0 : i32
    %c0_i32_2 = arith.constant 0 : i32
    return %arg0, %c0_i32, %c0_i32_0, %c0_i32_1 : i32, i32, i32, i32
  }
}

</mosaic_0001>

<llo_original>
// kernel: bce_dice_loss.1
$region0: #{bce_dice_loss.1}
  #allocation0 [shape = 'u32[]', space=smem, size = 0x4, offset = 0x4, fixed_abs, tag = 'smem constant byte address 0x4 - core index']
  #allocation1 [shape = 'u32[72,128]{1,0:T(1,128)}', space=vmem, size = 0x9000, scoped, tag = 'internal scratch']
  %s0 = inlined_call_operand.vmem [shape: f32[16,128], index: 0, kind: input, shape index: {}]
  %s1 = inlined_call_operand.vmem [shape: f32[16,128], index: 1, kind: input, shape index: {}]
  %s2 = inlined_call_operand.vmem [shape: f32[2,4,8,128], index: 2, kind: output, shape index: {}]
  %s3 = sld [smem:[#allocation0]]
  $region53: #{bce_dice_loss.1} parent=0
    _
  %s5 = ssub.s32 1, %s3
  %s6 = scalar_select 0, %s5, %s3
  loop: start=0, step=1, limit=4
  $region2: #{bce_dice_loss.1} parent=0 // loop_pre_header
    _
  $region3: #{bce_dice_loss.1} parent=0 // loop_header
    %s8 = sphi 0, %s12
    %p9 = scmp.ge.s32.totalorder %s8, 4
    %s15 = sphi 0, %s27
    %s16 = sphi 0, %s23
    %s17 = sphi 0, %s15
    %s18 = sphi 0, %s16
    %s19 = sphi 0, %s17
    %s20 = sphi 0, %s18
    %s36 = sphi 0, %s38
    %s39 = sphi 0, %s36
    %s40 = sphi 0, %s39
    %s56 = sphi 0, %s40
    %s68 = sphi 0, %s70
    %s71 = sphi 0, %s68
    %s72 = sphi 0, %s71
    %s88 = sphi 0, %s72
    %s94 = sphi 0, %s96
    %s97 = sphi 0, %s94
    %s98 = sphi 0, %s97
    %s114 = sphi 0, %s98
  $region4: #{bce_dice_loss.1} parent=0 // loop_header_branch
    %11 = sbr.rel (%p9) target = $region8
  $region5: #{bce_dice_loss.1} parent=0 // loop_body
    %s13 = ssub.s32 %s8, 1
    %s14 = ssub.s32 %s8, 2
    %s21 = sadd.s32 1, %s16
    %p22 = scmp.ge.s32.totalorder %s21, 1
    %s23 = scalar_select %p22, 0, %s21
    %s24 = sadd.s32 1, %s15
    %s25 = scalar_select %p22, %s24, %s15
    %p26 = scmp.ge.s32.totalorder %s25, 2
    %s27 = scalar_select %p26, 0, %s25
    %s28 = sadd.s32 %s15, %s16
    %p29 = scmp.lt.s32.totalorder %s28, 0
    %s30 = scalar_select %p29, %s28, 0
    %s31 = sadd.s32 %s27, %s23
    %p32 = scmp.lt.s32.totalorder %s31, 0
    %s33 = scalar_select %p32, %s31, 0
    %s34 = ssub.s32 %s30, %s33
    %p35 = scmp.eq.s32.totalorder %s34, 0
    %s37 = sadd.s32 %s36, 1
    %s38 = scalar_select %p35, %s36, %s37
    %p41 = pneg %p35
    %p42 = scmp.eq.s32.totalorder %s8, 1
    %p43 = por %p41, %p42
    %p44 = scmp.ne.s32.totalorder %s36, %s39
    %p45 = scmp.eq.s32.totalorder %s8, 0
    %p46 = por %p44, %p45
    %p47 = scmp.ne.s32.totalorder %s36, %s39
    %p48 = scmp.eq.s32.totalorder %s13, 1
    %p49 = por %p47, %p48
    %p50 = scmp.ne.s32.totalorder %s39, %s40
    %p51 = scmp.eq.s32.totalorder %s13, 0
    %p52 = por %p50, %p51
    %p53 = scmp.ne.s32.totalorder %s39, %s40
    %p54 = scmp.eq.s32.totalorder %s14, 1
    %p55 = por %p53, %p54
    %p57 = scmp.ne.s32.totalorder %s40, %s56
    %p58 = scmp.eq.s32.totalorder %s14, 0
    %p59 = por %p57, %p58
    %s60 = sadd.s32 %s15, %s16
    %p61 = scmp.lt.s32.totalorder %s60, 0
    %s62 = scalar_select %p61, %s60, 0
    %s63 = sadd.s32 %s27, %s23
    %p64 = scmp.lt.s32.totalorder %s63, 0
    %s65 = scalar_select %p64, %s63, 0
    %s66 = ssub.s32 %s62, %s65
    %p67 = scmp.eq.s32.totalorder %s66, 0
    %s69 = sadd.s32 %s68, 1
    %s70 = scalar_select %p67, %s68, %s69
    %p73 = pneg %p67
    %p74 = scmp.eq.s32.totalorder %s8, 1
    %p75 = por %p73, %p74
    %p76 = scmp.ne.s32.totalorder %s68, %s71
    %p77 = scmp.eq.s32.totalorder %s8, 0
    %p78 = por %p76, %p77
    %p79 = scmp.ne.s32.totalorder %s68, %s71
    %p80 = scmp.eq.s32.totalorder %s13, 1
    %p81 = por %p79, %p80
    %p82 = scmp.ne.s32.totalorder %s71, %s72
    %p83 = scmp.eq.s32.totalorder %s13, 0
    %p84 = por %p82, %p83
    %p85 = scmp.ne.s32.totalorder %s71, %s72
    %p86 = scmp.eq.s32.totalorder %s14, 1
    %p87 = por %p85, %p86
    %p89 = scmp.ne.s32.totalorder %s72, %s88
    %p90 = scmp.eq.s32.totalorder %s14, 0
    %p91 = por %p89, %p90
    %s92 = ssub.s32 %s15, %s27
    %p93 = scmp.eq.s32.totalorder %s92, 0
    %s95 = sadd.s32 %s94, 1
    %s96 = scalar_select %p93, %s94, %s95
    %p99 = pneg %p93
    %p100 = scmp.eq.s32.totalorder %s8, 1
    %p101 = por %p99, %p100
    %p102 = scmp.ne.s32.totalorder %s94, %s97
    %p103 = scmp.eq.s32.totalorder %s8, 0
    %p104 = por %p102, %p103
    %p105 = scmp.ne.s32.totalorder %s94, %s97
    %p106 = scmp.eq.s32.totalorder %s13, 1
    %p107 = por %p105, %p106
    %p108 = scmp.ne.s32.totalorder %s97, %s98
    %p109 = scmp.eq.s32.totalorder %s13, 0
    %p110 = por %p108, %p109
    %p111 = scmp.ne.s32.totalorder %s97, %s98
    %p112 = scmp.eq.s32.totalorder %s14, 1
    %p113 = por %p111, %p112
    %p115 = scmp.ne.s32.totalorder %s98, %s114
    %p116 = scmp.eq.s32.totalorder %s14, 0
    %p117 = por %p115, %p116
    %p118 = scmp.le.s32.totalorder 1, %s8
    %p119 = scmp.lt.s32.totalorder %s8, 3
    %p120 = pnand %p118, %p119
    %p121 = pneg %p120
    // Predicated region
    $region9: #{bce_dice_loss.1} parent=5 // pred_check
      _
    $region10: #{bce_dice_loss.1} parent=5 // pred_check_branch
      %123 = sbr.rel (%p120) target = $region12
    $region11: #{bce_dice_loss.1} parent=5 // pred_region
      %s124 = ssub.s32 %s8, 1
    $region12: #{bce_dice_loss.1} parent=5 // pred_fallthru
      _
    %p125 = scmp.lt.s32.totalorder %s8, 2
    // Predicated region
    $region13: #{bce_dice_loss.1} parent=5 // pred_check
      %p126 = pneg %p125
    $region14: #{bce_dice_loss.1} parent=5 // pred_check_branch
      %128 = sbr.rel (%p126) target = $region16
    $region15: #{bce_dice_loss.1} parent=5 // pred_region
      // Predicated region
      $region17: #{bce_dice_loss.1} parent=15 // pred_check
        %p129 = pneg %p46
      $region18: #{bce_dice_loss.1} parent=15 // pred_check_branch
        %131 = sbr.rel (%p129) target = $region20
      $region19: #{bce_dice_loss.1} parent=15 // pred_region
        %s132 = sadd.s32 %s15, %s16
        %p133 = scmp.lt.s32.totalorder %s132, 0
        %s134 = scalar_select %p133, %s132, 0
        %s135 = smul.u32 2, %s134
        %p136 = scmp.lt.s32.totalorder %s135, 1
        %s137 = scalar_select %p136, %s135, 1
        %s138 = smul.addr %s137, 8
        %s139 = scalar_lea.vmem %s0, %s138
        %s140 = sadd.s32 %s15, %s16
        %p141 = scmp.lt.s32.totalorder %s140, 0
        %s142 = scalar_select %p141, %s140, 0
        %s143 = smul.u32 2, %s142
      $region20: #{bce_dice_loss.1} parent=15 // pred_fallthru
        _
      // Predicated region
      $region21: #{bce_dice_loss.1} parent=15 // pred_check
        %p144 = pneg %p78
      $region22: #{bce_dice_loss.1} parent=15 // pred_check_branch
        %146 = sbr.rel (%p144) target = $region24
      $region23: #{bce_dice_loss.1} parent=15 // pred_region
        %s147 = sadd.s32 %s15, %s16
        %p148 = scmp.lt.s32.totalorder %s147, 0
        %s149 = scalar_select %p148, %s147, 0
        %s150 = smul.u32 2, %s149
        %p151 = scmp.lt.s32.totalorder %s150, 1
        %s152 = scalar_select %p151, %s150, 1
        %s153 = smul.addr %s152, 8
        %s154 = scalar_lea.vmem %s1, %s153
        %s155 = sadd.s32 %s15, %s16
        %p156 = scmp.lt.s32.totalorder %s155, 0
        %s157 = scalar_select %p156, %s155, 0
        %s158 = smul.u32 2, %s157
      $region24: #{bce_dice_loss.1} parent=15 // pred_fallthru
        _
    $region16: #{bce_dice_loss.1} parent=5 // pred_fallthru
      _
    %p159 = scmp.le.s32.totalorder 1, %s8
    %p160 = scmp.lt.s32.totalorder %s8, 3
    %p161 = pnand %p159, %p160
    %p162 = pneg %p161
    // Predicated region
    $region25: #{bce_dice_loss.1} parent=5 // pred_check
      _
    $region26: #{bce_dice_loss.1} parent=5 // pred_check_branch
      %164 = sbr.rel (%p161) target = $region28
    $region27: #{bce_dice_loss.1} parent=5 // pred_region
      %s165 = ssub.s32 %s8, 1
      %s166 = sadd.s32 %s17, %s18
      %p167 = scmp.lt.s32.totalorder %s166, 0
      %s168 = scalar_select %p167, %s166, 0
      %s169 = smul.u32 2, %s168
      %p170 = scmp.lt.s32.totalorder %s169, 1
      %s171 = scalar_select %p170, %s169, 1
      %s172 = smul.addr %s171, 8
      %s173 = scalar_lea.vmem %s0, %s172
      %p174 = pneg %p52
      %p175 = pneg %p49
      %s176 = sadd.s32 %s17, %s18
      %p177 = scmp.lt.s32.totalorder %s176, 0
      %s178 = scalar_select %p177, %s176, 0
      %s179 = smul.u32 2, %s178
      %p180 = scmp.lt.s32.totalorder %s179, 1
      %s181 = scalar_select %p180, %s179, 1
      %s182 = smul.addr %s181, 8
      %s183 = scalar_lea.vmem %s1, %s182
      %p184 = pneg %p84
      %p185 = pneg %p81
      %p186 = pneg %p110
      %p187 = pneg %p107
      %p188 = scmp.lt.s32.totalorder %s17, 1
      %s189 = scalar_select %p188, %s17, 1
      %s190 = smul.addr %s189, 4
      %s191 = smul.addr %s190, 8
      %s192 = scalar_lea.vmem %s2, %s191
      %s193 = sadd.s32 %s17, %s18
      %p194 = scmp.lt.s32.totalorder %s193, 0
      %s195 = scalar_select %p194, %s193, 0
      %s196 = smul.u32 2, %s195
      %p197 = scmp.lt.s32.totalorder %s196, 1
      %s198 = scalar_select %p197, %s196, 1
      %s199 = smul.addr %s198, 8
      %s200 = scalar_lea.vmem %s0, %s199
      %s201 = sadd.s32 %s17, %s18
      %p202 = scmp.lt.s32.totalorder %s201, 0
      %s203 = scalar_select %p202, %s201, 0
      %s204 = smul.u32 2, %s203
      %s205 = sadd.s32 %s17, %s18
      %p206 = scmp.lt.s32.totalorder %s205, 0
      %s207 = scalar_select %p206, %s205, 0
      %s208 = smul.u32 2, %s207
      %p209 = scmp.lt.s32.totalorder %s208, 1
      %s210 = scalar_select %p209, %s208, 1
      %s211 = smul.addr %s210, 8
      %s212 = scalar_lea.vmem %s1, %s211
      %s213 = sadd.s32 %s17, %s18
      %p214 = scmp.lt.s32.totalorder %s213, 0
      %s215 = scalar_select %p214, %s213, 0
      %s216 = smul.u32 2, %s215
      %p217 = scmp.lt.s32.totalorder %s17, 1
      %s218 = scalar_select %p217, %s17, 1
      %s219 = smul.addr %s218, 4
      %s220 = smul.addr %s219, 8
      %s221 = scalar_lea.vmem %s2, %s220
      %s222 = sadd.s32 %s17, %s18
      %p223 = scmp.eq.s32.totalorder %s18, 0
      // Predicated region
      $region29: #{bce_dice_loss.1} parent=27 // pred_check
        %p224 = pneg %p223
      $region30: #{bce_dice_loss.1} parent=27 // pred_check_branch
        %226 = sbr.rel (%p224) target = $region32
      $region31: #{bce_dice_loss.1} parent=27 // pred_region
        %227 = vst [vmem:[%s221] sm:$0xff] 0.0
        %228 = vst [vmem:[%s221 + $0x8] sm:$0xff] 0.0
        %229 = vst [vmem:[%s221 + $0x10] sm:$0xff] 0.0
        %230 = vst [vmem:[%s221 + $0x18] sm:$0xff] 0.0
      $region32: #{bce_dice_loss.1} parent=27 // pred_fallthru
        _
      %s231 = smul.u32 %s222, 16
      %p232 = scmp.lt.s32.totalorder %s231, 16
      %p233 = scmp.lt.s32.totalorder %s222, 1
      %p234 = pnand %p232, %p233
      %p235 = pneg %p234
      // Predicated region
      $region33: #{bce_dice_loss.1} parent=27 // pred_check
        _
      $region34: #{bce_dice_loss.1} parent=27 // pred_check_branch
        %237 = sbr.rel (%p234) target = $region36
      $region35: #{bce_dice_loss.1} parent=27 // pred_region
        %v238 = vld [vmem:[%s200] sm:$0xff]
        %v239 = vld [vmem:[%s200 + $0x8] sm:$0xff]
        %v240 = vld [vmem:[%s212] sm:$0xff]
        %v241 = vld [vmem:[%s212 + $0x8] sm:$0xff]
        %v242 = vand.u32 2147483647, %v238
        %v243 = vand.u32 2147483647, %v239
        %v244 = vsub.f32 0.0, %v242
        %v245 = vsub.f32 0.0, %v243
        %v246 = vmul.f32 %v244, 1.442695
        %v247 = vpow.pop %v246
        %v248 = vmul.f32 %v245, 1.442695
        %v249 = vpow.pop %v248
        %v250 = vmax.f32 %v238, 0.0
        %v251 = vmax.f32 %v239, 0.0
        %v252 = vmul.f32 %v238, %v240
        %v253 = vmul.f32 %v239, %v241
        %v254 = vsub.f32 %v250, %v252
        %v255 = vsub.f32 %v251, %v253
        %v256 = vadd.f32 %v247, 1.0
        %v257 = vlog2.pop %v256
        %v258 = vmul.f32 %v257, 0.6931472
        %v259 = vmul.f32 -0.5, %v247
        %v260 = vadd.f32 %v259, 1.0
        %v261 = vmul.f32 %v260, %v247
        %v262 = vand.u32 2147483647, %v247
        %vm263 = vcmp.lt.f32.partialorder %v262, 0.0004427343
        %v264 = vsel %vm263, %v261, %v258
        %v265 = vadd.f32 %v249, 1.0
        %v266 = vlog2.pop %v265
        %v267 = vmul.f32 %v266, 0.6931472
        %v268 = vmul.f32 -0.5, %v249
        %v269 = vadd.f32 %v268, 1.0
        %v270 = vmul.f32 %v269, %v249
        %v271 = vand.u32 2147483647, %v249
        %vm272 = vcmp.lt.f32.partialorder %v271, 0.0004427343
        %v273 = vsel %vm272, %v270, %v267
        %v274 = vadd.f32 %v254, %v264
        %v275 = vadd.f32 %v255, %v273
        %v276 = vadd.f32 %v247, 1.0
        %v277 = vadd.f32 %v249, 1.0
        %v278 = vrcp.pop %v276
        %v279 = vmul.f32 %v276, %v278
        %v280 = vsub.f32 1.0, %v279
        %v281 = vmul.f32 %v278, %v280
        %v282 = vadd.f32 %v278, %v281
        %vm283 = vweird.f32 %v276
        %vm284 = vweird.f32 %v278
        %vm285 = vmor %vm283, %vm284
        %v286 = vsel %vm285, %v278, %v282
        %v287 = vand.u32 2147483647, %v276
        %vm288 = vcmp.eq.f32.partialorder %v287, 8.507059e+37
        %v289 = vand.u32 %v276, 2147483648
        %v290 = vor.u32 1.1754944e-38, %v289
        %v291 = vsel %vm288, %v290, %v286
        %v292 = vrcp.pop %v277
        %v293 = vmul.f32 %v277, %v292
        %v294 = vsub.f32 1.0, %v293
        %v295 = vmul.f32 %v292, %v294
        %v296 = vadd.f32 %v292, %v295
        %vm297 = vweird.f32 %v277
        %vm298 = vweird.f32 %v292
        %vm299 = vmor %vm297, %vm298
        %v300 = vsel %vm299, %v292, %v296
        %v301 = vand.u32 2147483647, %v277
        %vm302 = vcmp.eq.f32.partialorder %v301, 8.507059e+37
        %v303 = vand.u32 %v277, 2147483648
        %v304 = vor.u32 1.1754944e-38, %v303
        %v305 = vsel %vm302, %v304, %v300
        %vm306 = vcmp.ge.f32.partialorder %v238, 0.0
        %vm307 = vcmp.ge.f32.partialorder %v239, 0.0
        %v308 = vmul.f32 %v247, %v291
        %v309 = vmul.f32 %v249, %v305
        %v310 = vsel %vm306, %v291, %v308
        %v311 = vsel %vm307, %v305, %v309
        %v312 = vadd.f32 %v274, %v275
        %v313 = vadd.f32 %v312, 0.0
        %v314 = vmul.f32 %v310, %v240
        %v315 = vmul.f32 %v311, %v241
        %v316 = vadd.f32 %v314, %v315
        %v317 = vadd.f32 %v316, 0.0
        %v318 = vadd.f32 %v310, %v311
        %v319 = vadd.f32 %v318, 0.0
        %v320 = vadd.f32 %v240, %v241
        %v321 = vadd.f32 %v320, 0.0
        %v322 = vld [vmem:[%s221] sm:$0xff]
        %v323 = vadd.f32 %v322, %v313
        %324 = vst [vmem:[%s221] sm:$0xff] %v323
        %s325 = scalar_lea.vmem %s221, 8
        %v326 = vld [vmem:[%s325] sm:$0xff]
        %v327 = vadd.f32 %v326, %v317
        %328 = vst [vmem:[%s325] sm:$0xff] %v327
        %s329 = scalar_lea.vmem %s221, 16
        %v330 = vld [vmem:[%s329] sm:$0xff]
        %v331 = vadd.f32 %v330, %v319
        %332 = vst [vmem:[%s329] sm:$0xff] %v331
        %s333 = scalar_lea.vmem %s221, 24
        %v334 = vld [vmem:[%s333] sm:$0xff]
        %v335 = vadd.f32 %v334, %v321
        %336 = vst [vmem:[%s333] sm:$0xff] %v335
      $region36: #{bce_dice_loss.1} parent=27 // pred_fallthru
        _
      %p337 = scmp.ge.s32.totalorder %s222, 1
      %p338 = pnand %p232, %p337
      %p339 = pneg %p338
      // Predicated region
      $region37: #{bce_dice_loss.1} parent=27 // pred_check
        _
      $region38: #{bce_dice_loss.1} parent=27 // pred_check_branch
        %341 = sbr.rel (%p338) target = $region40
      $region39: #{bce_dice_loss.1} parent=27 // pred_region
        %v342 = vld [vmem:[%s200] sm:$0xff]
        %v343 = vld [vmem:[%s200 + $0x8] sm:$0xff]
        %v344 = vld [vmem:[%s212] sm:$0xff]
        %v345 = vld [vmem:[%s212 + $0x8] sm:$0xff]
        %v346 = vlaneseq
        %v347 = vshrl.u32 %v346, 7
        %v348 = vadd.s32 %v347, 8
        %v349 = vlaneseq
        %v350 = vand.u32 %v349, 127
        %v351 = vstv %s231
        %v352 = vadd.s32 %v351, %v347
        %v353 = vadd.s32 %v351, %v348
        %vm354 = vcmp.lt.s32.totalorder %v352, 16
        %vm355 = vcmp.lt.s32.totalorder %v353, 16
        %vm356 = vcmp.eq.s32.totalorder %v352, 16
        %vm357 = vcmp.eq.s32.totalorder %v353, 16
        %vm358 = vcmp.lt.s32.totalorder %v350, 0
        %vm359 = vmand %vm356, %vm358
        %vm360 = vmand %vm357, %vm358
        %vm361 = vmor %vm354, %vm359
        %vm362 = vmor %vm355, %vm360
        %v363 = vsel %vm361, %v342, -10000.0
        %v364 = vsel %vm362, %v343, -10000.0
        %v365 = vsel %vm361, %v344, 0.0
        %v366 = vsel %vm362, %v345, 0.0
        %v367 = vand.u32 2147483647, %v363
        %v368 = vand.u32 2147483647, %v364
        %v369 = vsub.f32 0.0, %v367
        %v370 = vsub.f32 0.0, %v368
        %v371 = vmul.f32 %v369, 1.442695
        %v372 = vpow.pop %v371
        %v373 = vmul.f32 %v370, 1.442695
        %v374 = vpow.pop %v373
        %v375 = vmax.f32 %v363, 0.0
        %v376 = vmax.f32 %v364, 0.0
        %v377 = vmul.f32 %v363, %v365
        %v378 = vmul.f32 %v364, %v366
        %v379 = vsub.f32 %v375, %v377
        %v380 = vsub.f32 %v376, %v378
        %v381 = vadd.f32 %v372, 1.0
        %v382 = vlog2.pop %v381
        %v383 = vmul.f32 %v382, 0.6931472
        %v384 = vmul.f32 -0.5, %v372
        %v385 = vadd.f32 %v384, 1.0
        %v386 = vmul.f32 %v385, %v372
        %v387 = vand.u32 2147483647, %v372
        %vm388 = vcmp.lt.f32.partialorder %v387, 0.0004427343
        %v389 = vsel %vm388, %v386, %v383
        %v390 = vadd.f32 %v374, 1.0
        %v391 = vlog2.pop %v390
        %v392 = vmul.f32 %v391, 0.6931472
        %v393 = vmul.f32 -0.5, %v374
        %v394 = vadd.f32 %v393, 1.0
        %v395 = vmul.f32 %v394, %v374
        %v396 = vand.u32 2147483647, %v374
        %vm397 = vcmp.lt.f32.partialorder %v396, 0.0004427343
        %v398 = vsel %vm397, %v395, %v392
        %v399 = vadd.f32 %v379, %v389
        %v400 = vadd.f32 %v380, %v398
        %v401 = vadd.f32 %v372, 1.0
        %v402 = vadd.f32 %v374, 1.0
        %v403 = vrcp.pop %v401
        %v404 = vmul.f32 %v401, %v403
        %v405 = vsub.f32 1.0, %v404
        %v406 = vmul.f32 %v403, %v405
        %v407 = vadd.f32 %v403, %v406
        %vm408 = vweird.f32 %v401
        %vm409 = vweird.f32 %v403
        %vm410 = vmor %vm408, %vm409
        %v411 = vsel %vm410, %v403, %v407
        %v412 = vand.u32 2147483647, %v401
        %vm413 = vcmp.eq.f32.partialorder %v412, 8.507059e+37
        %v414 = vand.u32 %v401, 2147483648
        %v415 = vor.u32 1.1754944e-38, %v414
        %v416 = vsel %vm413, %v415, %v411
        %v417 = vrcp.pop %v402
        %v418 = vmul.f32 %v402, %v417
        %v419 = vsub.f32 1.0, %v418
        %v420 = vmul.f32 %v417, %v419
        %v421 = vadd.f32 %v417, %v420
        %vm422 = vweird.f32 %v402
        %vm423 = vweird.f32 %v417
        %vm424 = vmor %vm422, %vm423
        %v425 = vsel %vm424, %v417, %v421
        %v426 = vand.u32 2147483647, %v402
        %vm427 = vcmp.eq.f32.partialorder %v426, 8.507059e+37
        %v428 = vand.u32 %v402, 2147483648
        %v429 = vor.u32 1.1754944e-38, %v428
        %v430 = vsel %vm427, %v429, %v425
        %vm431 = vcmp.ge.f32.partialorder %v363, 0.0
        %vm432 = vcmp.ge.f32.partialorder %v364, 0.0
        %v433 = vmul.f32 %v372, %v416
        %v434 = vmul.f32 %v374, %v430
        %v435 = vsel %vm431, %v416, %v433
        %v436 = vsel %vm432, %v430, %v434
        %v437 = vadd.f32 %v399, %v400
        %v438 = vadd.f32 %v437, 0.0
        %v439 = vmul.f32 %v435, %v365
        %v440 = vmul.f32 %v436, %v366
        %v441 = vadd.f32 %v439, %v440
        %v442 = vadd.f32 %v441, 0.0
        %v443 = vadd.f32 %v435, %v436
        %v444 = vadd.f32 %v443, 0.0
        %v445 = vadd.f32 %v365, %v366
        %v446 = vadd.f32 %v445, 0.0
        %v447 = vld [vmem:[%s221] sm:$0xff]
        %v448 = vadd.f32 %v447, %v438
        %449 = vst [vmem:[%s221] sm:$0xff] %v448
        %s450 = scalar_lea.vmem %s221, 8
        %v451 = vld [vmem:[%s450] sm:$0xff]
        %v452 = vadd.f32 %v451, %v442
        %453 = vst [vmem:[%s450] sm:$0xff] %v452
        %s454 = scalar_lea.vmem %s221, 16
        %v455 = vld [vmem:[%s454] sm:$0xff]
        %v456 = vadd.f32 %v455, %v444
        %457 = vst [vmem:[%s454] sm:$0xff] %v456
        %s458 = scalar_lea.vmem %s221, 24
        %v459 = vld [vmem:[%s458] sm:$0xff]
        %v460 = vadd.f32 %v459, %v446
        %461 = vst [vmem:[%s458] sm:$0xff] %v460
      $region40: #{bce_dice_loss.1} parent=27 // pred_fallthru
        _
      %p462 = scmp.lt.s32.totalorder %s17, 1
      %s463 = scalar_select %p462, %s17, 1
      %s464 = smul.addr %s463, 4
      %s465 = smul.addr %s464, 8
      %s466 = scalar_lea.vmem %s2, %s465
      // Predicated region
      $region41: #{bce_dice_loss.1} parent=27 // pred_check
        %p467 = pneg %p107
      $region42: #{bce_dice_loss.1} parent=27 // pred_check_branch
        %469 = sbr.rel (%p467) target = $region44
      $region43: #{bce_dice_loss.1} parent=27 // pred_region
        _
      $region44: #{bce_dice_loss.1} parent=27 // pred_fallthru
        _
    $region28: #{bce_dice_loss.1} parent=5 // pred_fallthru
      _
    %p470 = scmp.le.s32.totalorder 2, %s8
    // Predicated region
    $region45: #{bce_dice_loss.1} parent=5 // pred_check
      %p471 = pneg %p470
    $region46: #{bce_dice_loss.1} parent=5 // pred_check_branch
      %473 = sbr.rel (%p471) target = $region48
    $region47: #{bce_dice_loss.1} parent=5 // pred_region
      %s474 = ssub.s32 %s8, 2
      // Predicated region
      $region49: #{bce_dice_loss.1} parent=47 // pred_check
        %p475 = pneg %p113
      $region50: #{bce_dice_loss.1} parent=47 // pred_check_branch
        %477 = sbr.rel (%p475) target = $region52
      $region51: #{bce_dice_loss.1} parent=47 // pred_region
        %p478 = scmp.lt.s32.totalorder %s19, 1
        %s479 = scalar_select %p478, %s19, 1
        %s480 = smul.addr %s479, 4
        %s481 = smul.addr %s480, 8
        %s482 = scalar_lea.vmem %s2, %s481
      $region52: #{bce_dice_loss.1} parent=47 // pred_fallthru
        _
    $region48: #{bce_dice_loss.1} parent=5 // pred_fallthru
      _
  $region6: #{bce_dice_loss.1} parent=0 // loop_footer
    %s12 = sadd.s32 1, %s8
  $region7: #{bce_dice_loss.1} parent=0 // loop_footer_branch
    %7 = sbr.rel target = $region3
  $region8: #{bce_dice_loss.1} parent=0 // loop_exit
    _

</llo_original>
